<compile_context>
chip_gen: v7x
topology: tpu7x:2x2x1
jax: 0.10.0
libtpu: 0.0.40
codegen_flags: <defaults>
</compile_context>

<pallas_src>
import functools

import jax
import jax.numpy as jnp
from jax.experimental import pallas as pl
from jax.experimental.pallas import tpu as pltpu


def _round_up(a, b):
    return (a + b - 1) // b * b


# ----------------------------------------------------------------------------
# Setup glue: per-sample bilinear taps (indices + weights), matching
# F.grid_sample(mode='bilinear', padding_mode='border', align_corners=False).
# ----------------------------------------------------------------------------
def _bilinear_taps(key, in_h, in_w, resolution, spp,
                   jitter_type="uniform", normal_std=1.0):
    res_h, res_w = resolution
    step_x = 2.0 / res_w
    step_y = 2.0 / res_h

    # torch.arange(-1, 1, step) -> res values starting at -1
    px = -1.0 + step_x * jnp.arange(res_w, dtype=jnp.float32)
    py = -1.0 + step_y * jnp.arange(res_h, dtype=jnp.float32)
    gx = jnp.broadcast_to(px[None, :], (res_h, res_w))   # meshgrid(indexing='xy')
    gy = jnp.broadcast_to(py[:, None], (res_h, res_w))

    if jitter_type == "uniform":
        jit = jax.random.uniform(key, (spp, res_h, res_w, 2), dtype=jnp.float32)
    elif jitter_type == "normal":
        jit = normal_std * jax.random.normal(
            key, (spp, res_h, res_w, 2), dtype=jnp.float32) + 0.5
    else:
        raise NotImplementedError(jitter_type)

    gx = gx[None] + jit[..., 0] * step_x          # (spp, res_h, res_w) x in [-1, 1)
    gy = gy[None] + jit[..., 1] * step_y          # (spp, res_h, res_w) y in [-1, 1)

    # grid_sample unnormalization, align_corners=False
    ix = ((gx + 1.0) * in_w - 1.0) * 0.5
    iy = ((gy + 1.0) * in_h - 1.0) * 0.5
    # padding_mode='border' -> clip coordinates
    ix = jnp.clip(ix, 0.0, in_w - 1.0)
    iy = jnp.clip(iy, 0.0, in_h - 1.0)

    x0 = jnp.floor(ix)
    y0 = jnp.floor(iy)
    wx1 = ix - x0
    wx0 = 1.0 - wx1
    wy1 = iy - y0
    wy0 = 1.0 - wy1

    x0i = x0.astype(jnp.int32)
    y0i = y0.astype(jnp.int32)
    x1i = jnp.clip(x0i + 1, 0, in_w - 1)
    y1i = jnp.clip(y0i + 1, 0, in_h - 1)

    p_out = res_h * res_w
    idx = jnp.stack([y0i * in_w + x0i, y0i * in_w + x1i,
                     y1i * in_w + x0i, y1i * in_w + x1i],
                    axis=-1).reshape(spp, p_out, 4)
    wgt = jnp.stack([wy0 * wx0, wy0 * wx1, wy1 * wx0, wy1 * wx1],
                    axis=-1).reshape(spp, p_out, 4)
    return idx, wgt


def _build_weight_matrix(idx, wgt, hw, spp, p_out, reduction, tn):
    """Sparse scatter-add build of the interpolation matrix.

    mean/sum : (HW, round_up(P_out, tn))   -- spp pre-reduced (linearity)
    other    : (HW, num_n * spp * tn)      -- per-N-tile packing: each output-column
               chunk of width tn carries its spp copies contiguously ([spp, tn]),
               so each weight block is a contiguous, lane-aligned (tk, spp*tn) tile.
    """
    if reduction in ("mean", "sum"):
        n_total = _round_up(p_out, tn)
        cols = jnp.broadcast_to(
            jnp.arange(p_out, dtype=jnp.int32)[None, :, None], idx.shape)
    else:
        num_n = _round_up(p_out, tn) // tn
        n_total = num_n * spp * tn
        p_arr = jnp.arange(p_out, dtype=jnp.int32)
        cols2 = ((p_arr // tn)[None, :] * (spp * tn)
                 + jnp.arange(spp, dtype=jnp.int32)[:, None] * tn
                 + (p_arr % tn)[None, :])                      # (spp, p_out)
        cols = jnp.broadcast_to(cols2[:, :, None], idx.shape)
    w = jnp.zeros((hw, n_total), dtype=jnp.float32)
    w = w.at[idx.reshape(-1), cols.reshape(-1)].add(wgt.reshape(-1))
    return w


# ----------------------------------------------------------------------------
# Pallas kernels: tiled matmul with fp32 accumulation.
#   grid = (num_m, num_n, num_k); K (reduction) axis last / "arbitrary".
# ----------------------------------------------------------------------------
def _linear_kernel_noacc(x_ref, w_ref, o_ref, *, scale, compute_dtype):
    """mean/sum with a float32 output: accumulate directly into o_ref."""
    k = pl.program_id(2)

    @pl.when(k == 0)
    def _():
        o_ref[...] = jnp.zeros_like(o_ref)

    o_ref[...] += jnp.dot(x_ref[...].astype(compute_dtype), w_ref[...],
                          preferred_element_type=jnp.float32)

    if scale != 1.0:
        @pl.when(k == pl.num_programs(2) - 1)
        def _():
            o_ref[...] = o_ref[...] * scale


def _linear_kernel_acc(x_ref, w_ref, o_ref, acc_ref, *, scale, compute_dtype):
    """mean/sum with a non-f32 output: fp32 scratch accumulator."""
    k = pl.program_id(2)

    @pl.when(k == 0)
    def _():
        acc_ref[...] = jnp.zeros_like(acc_ref)

    acc_ref[...] += jnp.dot(x_ref[...].astype(compute_dtype), w_ref[...],
                            preferred_element_type=jnp.float32)

    @pl.when(k == pl.num_programs(2) - 1)
    def _():
        o_ref[...] = (acc_ref[...] * scale).astype(o_ref.dtype)


def _packed_kernel(x_ref, w_ref, o_ref, acc_ref, *, reduction, spp, tn,
                   compute_dtype):
    """min/max/prod: weight block columns laid out [spp, tn]; reduce spp on the VPU."""
    k = pl.program_id(2)

    @pl.when(k == 0)
    def _():
        acc_ref[...] = jnp.zeros_like(acc_ref)

    acc_ref[...] += jnp.dot(x_ref[...].astype(compute_dtype), w_ref[...],
                            preferred_element_type=jnp.float32)

    @pl.when(k == pl.num_programs(2) - 1)
    def _():
        acc = acc_ref[...]
        # Static, lane-aligned slices (tn is a multiple of 128) + tree reduction.
        parts = [acc[:, s * tn:(s + 1) * tn] for s in range(spp)]
        if reduction == "max":
            op = jnp.maximum
        elif reduction == "min":
            op = jnp.minimum
        else:  # prod
            op = lambda a, b: a * b
        while len(parts) > 1:
            nxt = [op(parts[i], parts[i + 1]) for i in range(0, len(parts) - 1, 2)]
            if len(parts) % 2:
                nxt.append(parts[-1])
            parts = nxt
        o_ref[...] = parts[0].astype(o_ref.dtype)


# ----------------------------------------------------------------------------
# Tile selection: biggest tiles that fit the per-generation VMEM budget.
# ----------------------------------------------------------------------------
def _pick_tiles(bc_pad, hw, p_out, spp, packed, use_acc,
                x_item, w_item, out_item, vmem_budget):
    tm = min(bc_pad, 256)
    p_pad = _round_up(p_out, 128)

    tk_cands = [hw] if hw <= 2048 else [2048, 1024, 512]

    tn_cands = []
    t = min(p_pad, 2048 if packed else 8192)
    while True:
        tn_cands.append(t)
        if t <= 128:
            break
        t = max(128, (t // 2) // 128 * 128)

    for tk in tk_cands:
        act = 2 * tm * tk * x_item                      # double-buffered activations
        for tn in tn_cands:
            wcols = spp * tn if packed else tn
            need = (act
                    + 2 * tk * wcols * w_item           # double-buffered weight block
                    + 2 * tm * tn * out_item            # output block
                    + (tm * wcols * 4 if (packed or use_acc) else 0))  # acc scratch
            if need <= vmem_budget:
                return tm, tk, tn
    return tm, tk_cands[-1], 128                        # fallback: smallest tiles


# ----------------------------------------------------------------------------
# Wrapper
# ----------------------------------------------------------------------------
def stochastic_downsample(x, resolution, spp=16, reduction="mean",
                          jitter_type="uniform", normal_std=1.0, *, key,
                          compute_dtype=None):
    """x: (B, C, H, W) float -> (B, C, res_h, res_w)"""
    if reduction not in ("mean", "sum", "min", "max", "prod"):
        raise ValueError(reduction)
    b, c, h, w = x.shape
    res_h, res_w = resolution
    p_out = res_h * res_w
    hw = h * w
    bc = b * c

    # 'prod' compounds relative error across spp multiplies -> keep fp32 compute.
    if compute_dtype is None:
        compute_dtype = jnp.float32 if reduction == "prod" else jnp.bfloat16

    out_dtype = x.dtype
    x_item = jnp.dtype(x.dtype).itemsize
    w_item = jnp.dtype(compute_dtype).itemsize
    out_item = jnp.dtype(out_dtype).itemsize

    packed = reduction not in ("mean", "sum")
    use_acc = packed or (jnp.dtype(out_dtype) != jnp.dtype(jnp.float32))

    # ---- per-generation VMEM budget (v5e/v6e: 128 MiB, v7x: 64 MiB physical)
    try:
        vmem_cap = int(pltpu.get_tpu_info().vmem_capacity_bytes)
    except Exception:
        vmem_cap = 64 * 1024 * 1024
    vmem_limit = min(int(vmem_cap * 0.75), 100 * 1024 * 1024)
    vmem_budget = int(vmem_limit * 0.80)

    bc_pad = _round_up(bc, 8)
    tm, tk, tn = _pick_tiles(bc_pad, hw, p_out, spp, packed, use_acc,
                             x_item, w_item, out_item, vmem_budget)

    num_n = _round_up(p_out, tn) // tn
    # v7x megacore: M is the natural parallel axis; when a single M tile would cover
    # all rows and there is no N parallelism either, split M so both TCs get work.
    if num_n == 1 and bc_pad >= 16 and bc_pad <= tm:
        tm = _round_up((bc_pad + 1) // 2, 8)
    bc_pad = _round_up(bc_pad, tm)
    num_m = bc_pad // tm

    hw_pad = _round_up(hw, tk)
    num_k = hw_pad // tk

    wcols = spp * tn if packed else tn
    n_out_total = num_n * tn
    w_width = num_n * wcols

    # ---- operands (activations stay in their input dtype; cast happens in-kernel)
    x2d = x.reshape(bc, hw)
    if bc_pad != bc or hw_pad != hw:
        x2d = jnp.pad(x2d, ((0, bc_pad - bc), (0, hw_pad - hw)))

    idx, wgt = _bilinear_taps(key, h, w, resolution, spp,
                              jitter_type=jitter_type, normal_std=normal_std)
    w_mat = _build_weight_matrix(idx, wgt, hw, spp, p_out, reduction, tn)
    if hw_pad != hw:
        w_mat = jnp.pad(w_mat, ((0, hw_pad - hw), (0, 0)))
    w_mat = w_mat.astype(compute_dtype)

    scale = (1.0 / spp) if reduction == "mean" else 1.0

    if packed:
        kernel = functools.partial(_packed_kernel, reduction=reduction, spp=spp,
                                   tn=tn, compute_dtype=compute_dtype)
        scratch = [pltpu.VMEM((tm, wcols), jnp.float32)]
    elif use_acc:
        kernel = functools.partial(_linear_kernel_acc, scale=scale,
                                   compute_dtype=compute_dtype)
        scratch = [pltpu.VMEM((tm, tn), jnp.float32)]
    else:
        kernel = functools.partial(_linear_kernel_noacc, scale=scale,
                                   compute_dtype=compute_dtype)
        scratch = []

    cost = pl.CostEstimate(
        flops=int(2 * bc_pad * hw_pad * w_width),
        transcendentals=0,
        bytes_accessed=int(num_n * bc_pad * hw_pad * x_item
                           + num_m * hw_pad * w_width * w_item
                           + bc_pad * n_out_total * out_item),
    )

    out2d = pl.pallas_call(
        kernel,
        out_shape=jax.ShapeDtypeStruct((bc_pad, n_out_total), out_dtype),
        grid_spec=pltpu.PrefetchScalarGridSpec(
            num_scalar_prefetch=0,
            grid=(num_m, num_n, num_k),                # K (reduction) axis last
            in_specs=[
                pl.BlockSpec((tm, tk), lambda m, n, k: (m, k)),      # activations
                pl.BlockSpec((tk, wcols), lambda m, n, k: (k, n)),   # weights
            ],
            out_specs=pl.BlockSpec((tm, tn), lambda m, n, k: (m, n)),
            scratch_shapes=scratch,
        ),
        compiler_params=pltpu.CompilerParams(
            dimension_semantics=("parallel", "parallel", "arbitrary"),
            vmem_limit_bytes=vmem_limit,
        ),
        cost_estimate=cost,
    )(x2d, w_mat)

    return out2d[:bc, :p_out].reshape(b, c, res_h, res_w)


# ----------------------------------------------------------------------------
# Pure-JAX reference (4-tap gather form) for correctness checking.
# ----------------------------------------------------------------------------
def _reference_downsample(x, idx, wgt, resolution, reduction):
    b, c, h, w = x.shape
    x2 = x.reshape(b * c, h * w)
    vals = x2[:, idx]                                   # (bc, spp, p_out, 4)
    samples = jnp.sum(vals * wgt[None], axis=-1)        # (bc, spp, p_out)
    if reduction == "mean":
        out = samples.mean(axis=1)
    elif reduction == "sum":
        out = samples.sum(axis=1)
    elif reduction == "max":
        out = samples.max(axis=1)
    elif reduction == "min":
        out = samples.min(axis=1)
    else:
        out = jnp.prod(samples, axis=1)
    return out.reshape(b, c, resolution[0], resolution[1])


if __name__ == "__main__":
    key = jax.random.PRNGKey(0)
    k_x, k_jit = jax.random.split(key)

    B, C, H, W = 2, 4, 16, 16
    resolution = (4, 4)
    spp = 16

    x = jax.random.normal(k_x, (B, C, H, W), dtype=jnp.float32)
    idx, wgt = _bilinear_taps(k_jit, H, W, resolution, spp, "uniform", 1.0)

    for reduction in ("mean", "sum", "max", "min", "prod"):
        out = stochastic_downsample(x, resolution, spp=spp, reduction=reduction,
                                    jitter_type="uniform", key=k_jit)
        out = jax.block_until_ready(out)
        assert out.shape == (B, C, resolution[0], resolution[1])
        assert bool(jnp.all(jnp.isfinite(out)))
        ref = _reference_downsample(x, idx, wgt, resolution, reduction)
        assert bool(jnp.allclose(out, ref, rtol=1e-1, atol=5e-2)), reduction

    # exercise the normal-jitter path once as well
    out_n = stochastic_downsample(x, resolution, spp=spp, reduction="mean",
                                  jitter_type="normal", normal_std=1.0, key=k_jit)
    out_n = jax.block_until_ready(out_n)
    assert out_n.shape == (B, C, resolution[0], resolution[1])
    assert bool(jnp.all(jnp.isfinite(out_n)))

    print("KERNEL_OK")
</pallas_src>

<mosaic_0001>
module attributes {stable_mosaic.version = 11 : i64} {
  func.func @_linear_kernel_noacc(%arg0: i32, %arg1: i32, %arg2: i32, %arg3: memref<8x256xf32, #tpu.memory_space<vmem>>, %arg4: memref<256x128xbf16, #tpu.memory_space<vmem>>, %arg5: memref<8x128xf32, #tpu.memory_space<vmem>>) attributes {dimension_semantics = [#tpu.dimension_semantics<parallel>, #tpu.dimension_semantics<parallel>, #tpu.dimension_semantics<arbitrary>], iteration_bounds = array<i64: 1, 1, 1>, scalar_prefetch = 0 : i64, scratch_operands = 0 : i64, tpu.core_type = #tpu.core_type<tc>, window_params = [{transform_indices = @transform_0, window_bounds = array<i64: 8, 256>}, {transform_indices = @transform_1, window_bounds = array<i64: 256, 128>}, {transform_indices = @transform_2, window_bounds = array<i64: 8, 128>}]} {
    %c0_i32 = arith.constant 0 : i32
    %0 = arith.cmpi eq, %arg2, %c0_i32 : i32
    %1 = arith.extui %0 : i1 to i32
    %c0_i32_0 = arith.constant 0 : i32
    %2 = arith.cmpi ne, %1, %c0_i32_0 : i32
    scf.if %2 {
      %cst_10 = arith.constant 0.000000e+00 : f32
      %13 = vector.broadcast %cst_10 : f32 to vector<8x128xf32>
      %c0_11 = arith.constant 0 : index
      %c0_12 = arith.constant 0 : index
      %14 = vector.load %arg5[%c0_11, %c0_12] : memref<8x128xf32, #tpu.memory_space<vmem>>, vector<8x128xf32>
      tpu.vector_store %arg5[%c0_11, %c0_12], %13 {strides = array<i32>} : memref<8x128xf32, #tpu.memory_space<vmem>>, vector<8x128xf32>,
    } else {
    }
    %c0 = arith.constant 0 : index
    %c0_1 = arith.constant 0 : index
    %3 = vector.load %arg5[%c0, %c0_1] : memref<8x128xf32, #tpu.memory_space<vmem>>, vector<8x128xf32>
    %c0_2 = arith.constant 0 : index
    %c0_3 = arith.constant 0 : index
    %4 = vector.load %arg3[%c0_2, %c0_3] : memref<8x256xf32, #tpu.memory_space<vmem>>, vector<8x256xf32>
    %5 = arith.truncf %4 : vector<8x256xf32> to vector<8x256xbf16>
    %c0_4 = arith.constant 0 : index
    %c0_5 = arith.constant 0 : index
    %6 = vector.load %arg4[%c0_4, %c0_5] : memref<256x128xbf16, #tpu.memory_space<vmem>>, vector<256x128xbf16>
    %cst = arith.constant dense<0.000000e+00> : vector<8x128xf32>
    %7 = tpu.matmul %5, %6, %cst {dimension_numbers = #tpu.dot_dimension_numbers<[1], [0], [0], [1], [0, 0, 1, 1], [], []>} : vector<8x256xbf16>, vector<256x128xbf16>, vector<8x128xf32> -> vector<8x128xf32>
    %8 = arith.addf %3, %7 : vector<8x128xf32>
    %c0_6 = arith.constant 0 : index
    %c0_7 = arith.constant 0 : index
    %9 = vector.load %arg5[%c0_6, %c0_7] : memref<8x128xf32, #tpu.memory_space<vmem>>, vector<8x128xf32>
    tpu.vector_store %arg5[%c0_6, %c0_7], %8 {strides = array<i32>} : memref<8x128xf32, #tpu.memory_space<vmem>>, vector<8x128xf32>,
    %c0_i32_8 = arith.constant 0 : i32
    %10 = arith.cmpi eq, %arg2, %c0_i32_8 : i32
    %11 = arith.extui %10 : i1 to i32
    %c0_i32_9 = arith.constant 0 : i32
    %12 = arith.cmpi ne, %11, %c0_i32_9 : i32
    scf.if %12 {
      %c0_10 = arith.constant 0 : index
      %c0_11 = arith.constant 0 : index
      %13 = vector.load %arg5[%c0_10, %c0_11] : memref<8x128xf32, #tpu.memory_space<vmem>>, vector<8x128xf32>
      %cst_12 = arith.constant 6.250000e-02 : f32
      %14 = vector.broadcast %cst_12 : f32 to vector<8x128xf32>
      %15 = arith.mulf %13, %14 : vector<8x128xf32>
      %c0_13 = arith.constant 0 : index
      %c0_14 = arith.constant 0 : index
      %16 = vector.load %arg5[%c0_13, %c0_14] : memref<8x128xf32, #tpu.memory_space<vmem>>, vector<8x128xf32>
      tpu.vector_store %arg5[%c0_13, %c0_14], %15 {strides = array<i32>} : memref<8x128xf32, #tpu.memory_space<vmem>>, vector<8x128xf32>,
    } else {
    }
    return
  }
  func.func @transform_0(%arg0: i32, %arg1: i32, %arg2: i32) -> (i32, i32) {
    %c0_i32 = arith.constant 0 : i32
    return %arg0, %arg2 : i32, i32
  }
  func.func @transform_1(%arg0: i32, %arg1: i32, %arg2: i32) -> (i32, i32) {
    %c0_i32 = arith.constant 0 : i32
    return %arg2, %arg1 : i32, i32
  }
  func.func @transform_2(%arg0: i32, %arg1: i32, %arg2: i32) -> (i32, i32) {
    %c0_i32 = arith.constant 0 : i32
    return %arg0, %arg1 : i32, i32
  }
}

</mosaic_0001>

<llo_original>
// kernel: tpu_custom_call.1
$region0: #{tpu_custom_call.1}
  #allocation0 [shape = 'u32[]', space=smem, size = 0x4, offset = 0x4, fixed_abs, tag = 'smem constant byte address 0x4 - core index']
  #allocation1 [shape = 'u32[144,128]{1,0:T(1,128)}', space=vmem, size = 0x12000, scoped, tag = 'internal scratch']
  %s0 = inlined_call_operand.hbm [shape: f32[8,256], index: 0, kind: input, shape index: {}]
  %s1 = inlined_call_operand.hbm [shape: bf16[256,128], index: 1, kind: input, shape index: {}]
  %s2 = inlined_call_operand.hbm [shape: f32[8,128], index: 2, kind: output, shape index: {}]
  %s3 = sld [smem:[#allocation0]]
  $region34: #{tpu_custom_call.1} parent=0
    _
  %s5 = ssub.s32 1, %s3
  %s6 = scalar_select 0, %s5, %s3
  $region1: #{tpu_custom_call.1} parent=0
    #allocation2 [shape = 'u8[8192]{0}', space=vmem, size = 0x2000, scoped, tag = 'input window, operand 0, single buffered']
    #allocation3 [shape = 's32[1]{0}', space=sflag, size = 0x4, scoped, tag = 'scoped memory for tpu_custom_call.1']
    #allocation4 [shape = 's32[1]{0}', space=sflag, size = 0x4, scoped, tag = 'scoped memory for tpu_custom_call.1']
    #allocation5 [shape = 'u8[65536]{0}', space=vmem, size = 0x10000, scoped, tag = 'input window, operand 1, single buffered']
    #allocation6 [shape = 's32[1]{0}', space=sflag, size = 0x4, scoped, tag = 'scoped memory for tpu_custom_call.1']
    #allocation7 [shape = 'u8[4096]{0}', space=vmem, size = 0x1000, scoped, tag = 'output window, operand 0, single buffered']
    %7 = vsyncpa [#allocation3], 0
    %8 = vsyncpa [#allocation6], 0
    %9 = vsyncpa [#allocation4], 0
    // Predicated region
    $region2: #{tpu_custom_call.1} parent=1 // pred_check
      _
    $region3: #{tpu_custom_call.1} parent=1 // pred_check_branch
      %11 = sbr.rel (0) target = $region5
    $region4: #{tpu_custom_call.1} parent=1 // pred_region
      %s13 = ssub.s32 256, 256
      %14 = vsyncadd [#allocation3], %s13
      %s16 = sshll.u32 [#allocation2], 4
      %s17 = int_to_ptr.vmem [resolvable:$true] %s16
      %19 = dma.hbm_to_vmem [thread:$0]  %s0, 256, %s17, [#allocation3]
    $region5: #{tpu_custom_call.1} parent=1 // pred_fallthru
      _
    // Predicated region
    $region6: #{tpu_custom_call.1} parent=1 // pred_check
      _
    $region7: #{tpu_custom_call.1} parent=1 // pred_check_branch
      %21 = sbr.rel (0) target = $region9
    $region8: #{tpu_custom_call.1} parent=1 // pred_region
      %s23 = ssub.s32 2048, 2048
      %24 = vsyncadd [#allocation6], %s23
      %s25 = sshll.u32 [#allocation5], 4
      %s26 = int_to_ptr.vmem [resolvable:$true] %s25
      %31 = dma.hbm_to_vmem [thread:$0]  %s1, 2048, %s26, [#allocation6], 64, 64, 4
    $region9: #{tpu_custom_call.1} parent=1 // pred_fallthru
      _
    // Predicated region
    $region10: #{tpu_custom_call.1} parent=1 // pred_check
      _
    $region11: #{tpu_custom_call.1} parent=1 // pred_check_branch
      %33 = sbr.rel (0) target = $region13
    $region12: #{tpu_custom_call.1} parent=1 // pred_region
      %34 = dma.done [#allocation3], 256
    $region13: #{tpu_custom_call.1} parent=1 // pred_fallthru
      _
    // Predicated region
    $region14: #{tpu_custom_call.1} parent=1 // pred_check
      _
    $region15: #{tpu_custom_call.1} parent=1 // pred_check_branch
      %36 = sbr.rel (0) target = $region17
    $region16: #{tpu_custom_call.1} parent=1 // pred_region
      %37 = dma.done [#allocation6], 2048
    $region17: #{tpu_custom_call.1} parent=1 // pred_fallthru
      _
    %p39 = scmp.eq.s32.totalorder 0, 0
    // Predicated region
    $region18: #{tpu_custom_call.1} parent=1 // pred_check
      %p40 = pneg %p39
    $region19: #{tpu_custom_call.1} parent=1 // pred_check_branch
      %42 = sbr.rel (%p40) target = $region21
    $region20: #{tpu_custom_call.1} parent=1 // pred_region
      %43 = vst [vmem:[#allocation7] sm:$0xff] 0.0
    $region21: #{tpu_custom_call.1} parent=1 // pred_fallthru
      _
    %v44 = vld [vmem:[#allocation7] sm:$0xff]
    %v45 = vld [vmem:[#allocation2] sm:$0xff]
    %v46 = vld [vmem:[#allocation2 + $0x8] sm:$0xff]
    %v47 = vpack.c.bf16 %v45, %v45
    %v48 = vpack.c.bf16 %v46, %v46
    %v49 = vld [vmem:[#allocation5] sm:$0xf]
    %v50 = vld [vmem:[#allocation5 + $0x4] sm:$0xf]
    %v51 = vld [vmem:[#allocation5 + $0x8] sm:$0xf]
    %v52 = vld [vmem:[#allocation5 + $0xc] sm:$0xf]
    %v53 = vld [vmem:[#allocation5 + $0x10] sm:$0xf]
    %v54 = vld [vmem:[#allocation5 + $0x14] sm:$0xf]
    %v55 = vld [vmem:[#allocation5 + $0x18] sm:$0xf]
    %v56 = vld [vmem:[#allocation5 + $0x1c] sm:$0xf]
    %v57 = vld [vmem:[#allocation5 + $0x20] sm:$0xf]
    %v58 = vld [vmem:[#allocation5 + $0x24] sm:$0xf]
    %v59 = vld [vmem:[#allocation5 + $0x28] sm:$0xf]
    %v60 = vld [vmem:[#allocation5 + $0x2c] sm:$0xf]
    %v61 = vld [vmem:[#allocation5 + $0x30] sm:$0xf]
    %v62 = vld [vmem:[#allocation5 + $0x34] sm:$0xf]
    %v63 = vld [vmem:[#allocation5 + $0x38] sm:$0xf]
    %v64 = vld [vmem:[#allocation5 + $0x3c] sm:$0xf]
    %v65 = vld [vmem:[#allocation5 + $0x40] sm:$0xf]
    %v66 = vld [vmem:[#allocation5 + $0x44] sm:$0xf]
    %v67 = vld [vmem:[#allocation5 + $0x48] sm:$0xf]
    %v68 = vld [vmem:[#allocation5 + $0x4c] sm:$0xf]
    %v69 = vld [vmem:[#allocation5 + $0x50] sm:$0xf]
    %v70 = vld [vmem:[#allocation5 + $0x54] sm:$0xf]
    %v71 = vld [vmem:[#allocation5 + $0x58] sm:$0xf]
    %v72 = vld [vmem:[#allocation5 + $0x5c] sm:$0xf]
    %v73 = vld [vmem:[#allocation5 + $0x60] sm:$0xf]
    %v74 = vld [vmem:[#allocation5 + $0x64] sm:$0xf]
    %v75 = vld [vmem:[#allocation5 + $0x68] sm:$0xf]
    %v76 = vld [vmem:[#allocation5 + $0x6c] sm:$0xf]
    %v77 = vld [vmem:[#allocation5 + $0x70] sm:$0xf]
    %v78 = vld [vmem:[#allocation5 + $0x74] sm:$0xf]
    %v79 = vld [vmem:[#allocation5 + $0x78] sm:$0xf]
    %v80 = vld [vmem:[#allocation5 + $0x7c] sm:$0xf]
    %v113 = vunpack.c.l.b16 %v49
    %v114 = vunpack.c.l.b16 %v50
    %v115 = vunpack.c.l.b16 %v51
    %v116 = vunpack.c.l.b16 %v52
    %v117 = vunpack.c.l.b16 %v53
    %v118 = vunpack.c.l.b16 %v54
    %v119 = vunpack.c.l.b16 %v55
    %v120 = vunpack.c.l.b16 %v56
    %v121 = vunpack.c.l.b16 %v57
    %v122 = vunpack.c.l.b16 %v58
    %v123 = vunpack.c.l.b16 %v59
    %v124 = vunpack.c.l.b16 %v60
    %v125 = vunpack.c.l.b16 %v61
    %v126 = vunpack.c.l.b16 %v62
    %v127 = vunpack.c.l.b16 %v63
    %v128 = vunpack.c.l.b16 %v64
    %v129 = vunpack.c.l.b16 %v65
    %v130 = vunpack.c.l.b16 %v66
    %v131 = vunpack.c.l.b16 %v67
    %v132 = vunpack.c.l.b16 %v68
    %v133 = vunpack.c.l.b16 %v69
    %v134 = vunpack.c.l.b16 %v70
    %v135 = vunpack.c.l.b16 %v71
    %v136 = vunpack.c.l.b16 %v72
    %v137 = vunpack.c.l.b16 %v73
    %v138 = vunpack.c.l.b16 %v74
    %v139 = vunpack.c.l.b16 %v75
    %v140 = vunpack.c.l.b16 %v76
    %v141 = vunpack.c.l.b16 %v77
    %v142 = vunpack.c.l.b16 %v78
    %v143 = vunpack.c.l.b16 %v79
    %v144 = vunpack.c.l.b16 %v80
    %v145 = vpack.c.b16 %v114, %v113
    %v146 = vpack.c.b16 %v116, %v115
    %v147 = vpack.c.b16 %v118, %v117
    %v148 = vpack.c.b16 %v120, %v119
    %v149 = vpack.c.b16 %v122, %v121
    %v150 = vpack.c.b16 %v124, %v123
    %v151 = vpack.c.b16 %v126, %v125
    %v152 = vpack.c.b16 %v128, %v127
    %v153 = vpack.c.b16 %v130, %v129
    %v154 = vpack.c.b16 %v132, %v131
    %v155 = vpack.c.b16 %v134, %v133
    %v156 = vpack.c.b16 %v136, %v135
    %v157 = vpack.c.b16 %v138, %v137
    %v158 = vpack.c.b16 %v140, %v139
    %v159 = vpack.c.b16 %v142, %v141
    %v160 = vpack.c.b16 %v144, %v143
    %177 = vmatprep.subr.bf16.mxu0 0
    %178 = vmatpush1.bf16.msra.mxu0 %v145
    %179 = vmatprep.subr.bf16.mxu0 0
    %180 = vmatpush1.bf16.msra.mxu0 %v146
    %181 = vmatprep.subr.bf16.mxu0 0
    %182 = vmatpush1.bf16.msra.mxu0 %v147
    %183 = vmatprep.subr.bf16.mxu0 0
    %184 = vmatpush1.bf16.msra.mxu0 %v148
    %185 = vmatprep.subr.bf16.mxu0 0
    %186 = vmatpush1.bf16.msra.mxu0 %v149
    %187 = vmatprep.subr.bf16.mxu0 0
    %188 = vmatpush1.bf16.msra.mxu0 %v150
    %189 = vmatprep.subr.bf16.mxu0 0
    %190 = vmatpush1.bf16.msra.mxu0 %v151
    %191 = vmatprep.subr.bf16.mxu0 0
    %192 = vmatpush1.bf16.msra.mxu0 %v152
    %193 = vmatprep.subr.bf16.mxu0 0
    %194 = vmatpush1.bf16.msra.mxu0 %v153
    %195 = vmatprep.subr.bf16.mxu0 0
    %196 = vmatpush1.bf16.msra.mxu0 %v154
    %197 = vmatprep.subr.bf16.mxu0 0
    %198 = vmatpush1.bf16.msra.mxu0 %v155
    %199 = vmatprep.subr.bf16.mxu0 0
    %200 = vmatpush1.bf16.msra.mxu0 %v156
    %201 = vmatprep.subr.bf16.mxu0 0
    %202 = vmatpush1.bf16.msra.mxu0 %v157
    %203 = vmatprep.subr.bf16.mxu0 0
    %204 = vmatpush1.bf16.msra.mxu0 %v158
    %205 = vmatprep.subr.bf16.mxu0 0
    %206 = vmatpush1.bf16.msra.mxu0 %v159
    %207 = vmatprep.subr.bf16.mxu0 0
    %208 = vmatpush1.bf16.msra.mxu0 %v160
    %209 = vmatprep.mubr.bf16.mxu0 %v48
    %210 = vmatmul.mubr.bf16.gmra.mrb[0].mxu0 %v47
    %v211 = vpop.f32.mrb[0].mxu0
    %v212 = vadd.f32 0.0, %v211
    %v213 = vpop.f32.mrb[0].mxu0
    %v214 = vpop.f32.mrb[0].mxu0
    %v215 = vpop.f32.mrb[0].mxu0
    %216 = vdwg.mxu0
    %v217 = vadd.f32 %v44, %v212
    %218 = vst [vmem:[#allocation7] sm:$0xff] %v217
    // Predicated region
    $region22: #{tpu_custom_call.1} parent=1 // pred_check
      %p219 = pneg %p39
    $region23: #{tpu_custom_call.1} parent=1 // pred_check_branch
      %221 = sbr.rel (%p219) target = $region25
    $region24: #{tpu_custom_call.1} parent=1 // pred_region
      %v222 = vld [vmem:[#allocation7] sm:$0xff]
      %v223 = vmul.f32 %v222, 0.0625
      %224 = vst [vmem:[#allocation7] sm:$0xff] %v223
    $region25: #{tpu_custom_call.1} parent=1 // pred_fallthru
      _
    // Predicated region
    $region26: #{tpu_custom_call.1} parent=1 // pred_check
      _
    $region27: #{tpu_custom_call.1} parent=1 // pred_check_branch
      %226 = sbr.rel (0) target = $region29
    $region28: #{tpu_custom_call.1} parent=1 // pred_region
      %s228 = ssub.s32 128, 128
      %229 = vsyncadd [#allocation4], %s228
      %s231 = sshll.u32 [#allocation7], 4
      %s232 = int_to_ptr.vmem [resolvable:$true] %s231
      %234 = dma.vmem_to_hbm [thread:$0]  %s232, 128, %s2, [#allocation4]
    $region29: #{tpu_custom_call.1} parent=1 // pred_fallthru
      _
    // Predicated region
    $region30: #{tpu_custom_call.1} parent=1 // pred_check
      _
    $region31: #{tpu_custom_call.1} parent=1 // pred_check_branch
      %236 = sbr.rel (0) target = $region33
    $region32: #{tpu_custom_call.1} parent=1 // pred_region
      %237 = dma.done [#allocation4], 128
    $region33: #{tpu_custom_call.1} parent=1 // pred_fallthru
      _
    %238 = vsyncpa [#allocation3], 1
    %239 = vsyncpa [#allocation6], 1
    %240 = vsyncpa [#allocation4], 1

</llo_original>
